<compile_context>
chip_gen: v5e
topology: v5e:2x2
jax: 0.10.0
libtpu: 0.0.40
codegen_flags: <defaults>
</compile_context>

<pallas_src>
import functools

import jax
import jax.numpy as jnp
from jax.experimental import pallas as pl
from jax.experimental.pallas import tpu as pltpu


_MIB = 1024 * 1024


def _cdiv(a: int, b: int) -> int:
    return -(-a // b)


def _round_up(x: int, m: int) -> int:
    return _cdiv(x, m) * m


@functools.lru_cache(maxsize=1)
def _vmem_capacity_bytes() -> int:
    try:
        cap = getattr(pltpu.get_tpu_info(), "vmem_capacity_bytes", None)
        if cap:
            return int(cap)
    except Exception:
        pass
    return 64 * _MIB  # conservative default (v7x per-TC VMEM)


def _gen_config():
    cap = _vmem_capacity_bytes()
    if cap >= 100 * _MIB:
        # v5e / v6e: 128 MiB VMEM, single TensorCore per chip.
        return {"vmem_limit": 96 * _MIB, "resident_thresh": 56 * _MIB,
                "min_parallel": 1}
    # v7x (or unknown): 64 MiB per TensorCore, 2 TensorCores per chip.
    return {"vmem_limit": 40 * _MIB, "resident_thresh": 24 * _MIB,
            "min_parallel": 2}


def _pick_tile(dim: int, tile_max: int, align: int, min_blocks: int = 1):
    """Tile <= ~tile_max (multiple of `align`), chosen as a near-divisor of
    the align-rounded dim so padding stays tiny.  Returns (tile, padded_dim)."""
    dim_al = _round_up(dim, align)
    max_blocks = dim_al // align
    n = max(min(min_blocks, max_blocks), _cdiv(dim_al, max(tile_max, align)))
    tile = _round_up(_cdiv(dim_al, n), align)
    return tile, _round_up(dim_al, tile)


def _pad2(arr, rows: int, cols: int):
    r, c = arr.shape
    if (r, c) == (rows, cols):
        return arr
    return jnp.pad(arr, ((0, rows - r), (0, cols - c)))


# ---------------------------------------------------------------------------
# Kernels
# ---------------------------------------------------------------------------
def _resident_kernel(a_ref, b_ref, o_ref):
    """One operand fully resident in VMEM; single MXU dot per grid step."""
    o_ref[...] = jnp.dot(
        a_ref[...], b_ref[...], preferred_element_type=jnp.float32
    ).astype(o_ref.dtype)


def _general_kernel_f32out(a_ref, b_ref, o_ref):
    """(i, j, k) grid, k = reduction; f32 output doubles as the accumulator."""

    @pl.when(pl.program_id(2) == 0)
    def _():
        o_ref[...] = jnp.zeros_like(o_ref)

    o_ref[...] += jnp.dot(a_ref[...], b_ref[...],
                          preferred_element_type=jnp.float32)


def _general_kernel_scratch(a_ref, b_ref, o_ref, acc_ref):
    """(i, j, k) grid with a separate f32 accumulator (non-f32 outputs)."""

    @pl.when(pl.program_id(2) == 0)
    def _():
        acc_ref[...] = jnp.zeros_like(acc_ref)

    acc_ref[...] += jnp.dot(a_ref[...], b_ref[...],
                            preferred_element_type=jnp.float32)

    @pl.when(pl.program_id(2) == pl.num_programs(2) - 1)
    def _():
        o_ref[...] = acc_ref[...].astype(o_ref.dtype)


# ---------------------------------------------------------------------------
# Wrapper
# ---------------------------------------------------------------------------
def linear_layer(matrix, x, *, tm=None, tn=None, tk=None, mxu_dtype=None,
                 _force_path=None):
    """Pallas TPU equivalent of LinearLayer.forward: returns matrix @ x.

    mxu_dtype: optional narrower MXU operand dtype (e.g. jnp.bfloat16, or an
      fp8 dtype on v7x).  Operands are cast ONCE here in the wrapper;
      accumulation stays f32.  Default None preserves exact f32 semantics.
    """
    assert matrix.ndim == 2 and x.ndim == 2, "expect 2-D matmul like torch `@`"
    M, K = matrix.shape
    K2, N = x.shape
    assert K == K2, "inner dims must match"

    cfg = _gen_config()
    out_dtype = jnp.result_type(matrix.dtype, x.dtype)

    # Wrapper-side cast: halves HBM bytes / VMEM footprint and removes the
    # per-k-step VPU convert the old in-kernel cast did.
    a_in = matrix if mxu_dtype is None else matrix.astype(mxu_dtype)
    b_in = x if mxu_dtype is None else x.astype(mxu_dtype)
    a_bytes = jnp.dtype(a_in.dtype).itemsize
    b_bytes = jnp.dtype(b_in.dtype).itemsize
    o_bytes = jnp.dtype(out_dtype).itemsize

    cost = pl.CostEstimate(
        flops=2 * M * N * K,
        transcendentals=0,
        bytes_accessed=M * K * a_bytes + K * N * b_bytes + M * N * o_bytes,
    )

    M8, K128, N128 = _round_up(M, 8), _round_up(K, 128), _round_up(N, 128)
    min_par = cfg["min_parallel"]

    # ----- candidate fast paths: keep one operand fully resident in VMEM ----
    # Pallas double-buffers every input spec by default -> count 2x each.
    tm_f, M_pad_x = _pick_tile(M, 512, 8, min_par)
    x_resident_bytes = (2 * K128 * N128 * b_bytes
                        + 2 * tm_f * K128 * a_bytes
                        + 2 * tm_f * N128 * o_bytes)

    tn_f, N_pad_a = _pick_tile(N, 512, 128, min_par)
    a_resident_bytes = (2 * M8 * K128 * a_bytes
                        + 2 * K128 * tn_f * b_bytes
                        + 2 * M8 * tn_f * o_bytes)

    path = _force_path
    if path is None:
        if x_resident_bytes <= cfg["resident_thresh"]:
            path = "resident_x"
        elif a_resident_bytes <= cfg["resident_thresh"]:
            path = "resident_a"
        else:
            path = "general"

    if path == "resident_x":
        # x (K, N) stays in VMEM; weights stream through once; grid over M.
        a = _pad2(a_in, M_pad_x, K128)
        b = _pad2(b_in, K128, N128)
        out = pl.pallas_call(
            _resident_kernel,
            out_shape=jax.ShapeDtypeStruct((M_pad_x, N128), out_dtype),
            grid_spec=pltpu.PrefetchScalarGridSpec(
                num_scalar_prefetch=0,
                grid=(M_pad_x // tm_f,),
                in_specs=[
                    pl.BlockSpec((tm_f, K128), lambda i: (i, 0)),
                    pl.BlockSpec((K128, N128), lambda i: (0, 0)),
                ],
                out_specs=pl.BlockSpec((tm_f, N128), lambda i: (i, 0)),
            ),
            compiler_params=pltpu.CompilerParams(
                dimension_semantics=("parallel",),
                vmem_limit_bytes=cfg["vmem_limit"],
            ),
            cost_estimate=cost,
        )(a, b)
        return out[:M, :N]

    if path == "resident_a":
        # matrix (M, K) stays in VMEM; x streams through once; grid over N.
        a = _pad2(a_in, M8, K128)
        b = _pad2(b_in, K128, N_pad_a)
        out = pl.pallas_call(
            _resident_kernel,
            out_shape=jax.ShapeDtypeStruct((M8, N_pad_a), out_dtype),
            grid_spec=pltpu.PrefetchScalarGridSpec(
                num_scalar_prefetch=0,
                grid=(N_pad_a // tn_f,),
                in_specs=[
                    pl.BlockSpec((M8, K128), lambda j: (0, 0)),
                    pl.BlockSpec((K128, tn_f), lambda j: (0, j)),
                ],
                out_specs=pl.BlockSpec((M8, tn_f), lambda j: (0, j)),
            ),
            compiler_params=pltpu.CompilerParams(
                dimension_semantics=("parallel",),
                vmem_limit_bytes=cfg["vmem_limit"],
            ),
            cost_estimate=cost,
        )(a, b)
        return out[:M, :N]

    # --------------------- general path: (i, j, k) grid ---------------------
    narrow = a_bytes <= 2 and b_bytes <= 2
    tm_max = tm if tm is not None else 512
    tn_max = tn if tn is not None else (1024 if narrow else 512)
    tk_max = tk if tk is not None else (2048 if narrow else 1024)

    tm_t, M_pad = _pick_tile(M, tm_max, 8, min_par)
    tn_t, N_pad = _pick_tile(N, tn_max, 128)
    tk_t, K_pad = _pick_tile(K, tk_max, 128)

    acc_in_out = jnp.dtype(out_dtype) == jnp.dtype(jnp.float32)
    kernel = _general_kernel_f32out if acc_in_out else _general_kernel_scratch
    scratch = () if acc_in_out else (pltpu.VMEM((tm_t, tn_t), jnp.float32),)

    a = _pad2(a_in, M_pad, K_pad)
    b = _pad2(b_in, K_pad, N_pad)

    out = pl.pallas_call(
        kernel,
        out_shape=jax.ShapeDtypeStruct((M_pad, N_pad), out_dtype),
        grid_spec=pltpu.PrefetchScalarGridSpec(
            num_scalar_prefetch=0,
            grid=(M_pad // tm_t, N_pad // tn_t, K_pad // tk_t),
            in_specs=[
                pl.BlockSpec((tm_t, tk_t), lambda i, j, k: (i, k)),
                pl.BlockSpec((tk_t, tn_t), lambda i, j, k: (k, j)),
            ],
            out_specs=pl.BlockSpec((tm_t, tn_t), lambda i, j, k: (i, j)),
            scratch_shapes=scratch,
        ),
        compiler_params=pltpu.CompilerParams(
            dimension_semantics=("parallel", "parallel", "arbitrary"),
            vmem_limit_bytes=cfg["vmem_limit"],
        ),
        cost_estimate=cost,
    )(a, b)
    return out[:M, :N]


if __name__ == "__main__":
    key = jax.random.PRNGKey(0)
    k1, k2, k3, k4, k5, k6 = jax.random.split(key, 6)

    # ---- Test 1: resident-x fast path, non-aligned shapes -> minimal padding.
    M1, K1, N1 = 96, 200, 30
    mat1 = jax.random.normal(k1, (M1, K1), dtype=jnp.float32)
    x1 = jax.random.normal(k2, (K1, N1), dtype=jnp.float32)
    out1 = jax.block_until_ready(linear_layer(mat1, x1))
    ref1 = mat1 @ x1
    assert out1.shape == (M1, N1)
    assert jnp.allclose(out1, ref1, atol=1e-3, rtol=1e-3), "resident-x mismatch"

    # ---- Test 2: resident-A fast path (forced), grid over N only.
    M2, K2, N2 = 40, 136, 260
    mat2 = jax.random.normal(k3, (M2, K2), dtype=jnp.float32)
    x2 = jax.random.normal(k4, (K2, N2), dtype=jnp.float32)
    out2 = jax.block_until_ready(linear_layer(mat2, x2, _force_path="resident_a"))
    ref2 = mat2 @ x2
    assert out2.shape == (M2, N2)
    assert jnp.allclose(out2, ref2, atol=1e-3, rtol=1e-3), "resident-A mismatch"

    # ---- Test 3: general 3-D-grid path (forced), multi-step reduction grid.
    M3, K3, N3 = 256, 512, 192
    mat3 = jax.random.normal(k5, (M3, K3), dtype=jnp.float32)
    x3 = jax.random.normal(k6, (K3, N3), dtype=jnp.float32)
    out3 = jax.block_until_ready(
        linear_layer(mat3, x3, tm=128, tn=128, tk=256, _force_path="general")
    )
    ref3 = mat3 @ x3
    assert out3.shape == (M3, N3)
    assert jnp.allclose(out3, ref3, atol=1e-3, rtol=1e-3), "general-path mismatch"

    # ---- Test 4: general path with wrapper-cast bf16 MXU operands, f32 acc.
    # Numerics intentionally relaxed vs. the strict f32 torch reference.
    out4 = jax.block_until_ready(
        linear_layer(mat3, x3, tm=128, tn=128, tk=256,
                     mxu_dtype=jnp.bfloat16, _force_path="general")
    )
    ref4 = (mat3.astype(jnp.bfloat16).astype(jnp.float32)
            @ x3.astype(jnp.bfloat16).astype(jnp.float32))
    assert out4.shape == (M3, N3)
    assert jnp.allclose(out4, ref4, atol=5e-2, rtol=5e-2), "bf16 MXU path mismatch"

    print("KERNEL_OK")
</pallas_src>

<mosaic_0001>
module attributes {stable_mosaic.version = 11 : i64} {
  func.func @_resident_kernel(%arg0: i32, %arg1: memref<48x256xf32, #tpu.memory_space<vmem>>, %arg2: memref<256x128xf32, #tpu.memory_space<vmem>>, %arg3: memref<48x128xf32, #tpu.memory_space<vmem>>) attributes {dimension_semantics = [#tpu.dimension_semantics<parallel>], iteration_bounds = array<i64: 2>, scalar_prefetch = 0 : i64, scratch_operands = 0 : i64, tpu.core_type = #tpu.core_type<tc>, window_params = [{transform_indices = @transform_0, window_bounds = array<i64: 48, 256>}, {pipeline_mode = #tpu.pipeline_mode<synchronous>, transform_indices = @transform_1, window_bounds = array<i64: 256, 128>}, {transform_indices = @transform_2, window_bounds = array<i64: 48, 128>}]} {
    %c0 = arith.constant 0 : index
    %c0_0 = arith.constant 0 : index
    %0 = vector.load %arg1[%c0, %c0_0] : memref<48x256xf32, #tpu.memory_space<vmem>>, vector<48x256xf32>
    %c0_1 = arith.constant 0 : index
    %c0_2 = arith.constant 0 : index
    %1 = vector.load %arg2[%c0_1, %c0_2] : memref<256x128xf32, #tpu.memory_space<vmem>>, vector<256x128xf32>
    %cst = arith.constant dense<0.000000e+00> : vector<48x128xf32>
    %2 = tpu.matmul %0, %1, %cst {dimension_numbers = #tpu.dot_dimension_numbers<[1], [0], [0], [1], [0, 0, 1, 1], [], []>} : vector<48x256xf32>, vector<256x128xf32>, vector<48x128xf32> -> vector<48x128xf32>
    %c0_3 = arith.constant 0 : index
    %c0_4 = arith.constant 0 : index
    %3 = vector.load %arg3[%c0_3, %c0_4] : memref<48x128xf32, #tpu.memory_space<vmem>>, vector<48x128xf32>
    tpu.vector_store %arg3[%c0_3, %c0_4], %2 {strides = array<i32>} : memref<48x128xf32, #tpu.memory_space<vmem>>, vector<48x128xf32>,
    return
  }
  func.func @transform_0(%arg0: i32) -> (i32, i32) {
    %c0_i32 = arith.constant 0 : i32
    %c0_i32_0 = arith.constant 0 : i32
    return %arg0, %c0_i32 : i32, i32
  }
  func.func @transform_1(%arg0: i32) -> (i32, i32) {
    %c0_i32 = arith.constant 0 : i32
    %c0_i32_0 = arith.constant 0 : i32
    %c0_i32_1 = arith.constant 0 : i32
    return %c0_i32, %c0_i32_0 : i32, i32
  }
  func.func @transform_2(%arg0: i32) -> (i32, i32) {
    %c0_i32 = arith.constant 0 : i32
    %c0_i32_0 = arith.constant 0 : i32
    return %arg0, %c0_i32 : i32, i32
  }
}

</mosaic_0001>

<llo_original>
// kernel: tpu_custom_call.1
$region0: #{tpu_custom_call.1}
  #allocation0 [shape = 'u32[]', space=smem, size = 0x4, offset = 0x4, fixed_abs, tag = 'smem constant byte address 0x4 - core index']
  #allocation1 [shape = 'u32[72,128]{1,0:T(1,128)}', space=vmem, size = 0x9000, scoped, tag = 'internal scratch']
  %s0 = inlined_call_operand.hbm [shape: f32[96,256], index: 0, kind: input, shape index: {}]
  %s1 = inlined_call_operand.hbm [shape: f32[256,128], index: 1, kind: input, shape index: {}]
  %s2 = inlined_call_operand.hbm [shape: f32[96,128], index: 2, kind: output, shape index: {}]
  %s3 = sld [smem:[#allocation0]]
  $region49: #{tpu_custom_call.1} parent=0
    _
  %s5 = ssub.s32 1, %s3
  %s6 = scalar_select 0, %s5, %s3
  $region1: #{tpu_custom_call.1} parent=0
    #allocation2 [shape = 'u8[98304]{0}', space=vmem, size = 0x18000, scoped, tag = 'input window, operand 0']
    #allocation3 [shape = 's32[2]{0}', space=sflag, size = 0x8, scoped, tag = 'scoped memory for tpu_custom_call.1']
    #allocation4 [shape = 's32[2]{0}', space=sflag, size = 0x8, scoped, tag = 'scoped memory for tpu_custom_call.1']
    #allocation5 [shape = 'u8[131072]{0}', space=vmem, size = 0x20000, scoped, tag = 'input window, operand 1, single buffered']
    #allocation6 [shape = 's32[1]{0}', space=sflag, size = 0x4, scoped, tag = 'scoped memory for tpu_custom_call.1']
    #allocation7 [shape = 'u8[49152]{0}', space=vmem, size = 0xc000, scoped, tag = 'output window, operand 0']
    %7 = vsyncpa [#allocation3], 0
    %s8 = scalar_lea.sflag [#allocation3], 1
    %9 = vsyncpa %s8, 0
    %10 = vsyncpa [#allocation6], 0
    %11 = vsyncpa [#allocation4], 0
    %s12 = scalar_lea.sflag [#allocation4], 1
    %13 = vsyncpa %s12, 0
    loop: start=0, step=1, limit=4
    $region2: #{tpu_custom_call.1} parent=1 // loop_pre_header
      _
    $region3: #{tpu_custom_call.1} parent=1 // loop_header
      %s15 = sphi 0, %s19
      %p16 = scmp.ge.s32.totalorder %s15, 4
      %s25 = sphi 0, %s27
      %s28 = sphi 0, %s25
      %s29 = sphi 0, %s28
      %s45 = sphi 0, %s29
      %s49 = sphi 0, %s49
      %s51 = sphi 0, %s49
      %s52 = sphi 0, %s51
      %s66 = sphi 0, %s52
      %s72 = sphi 0, %s74
      %s75 = sphi 0, %s72
      %s76 = sphi 0, %s75
      %s92 = sphi 0, %s76
    $region4: #{tpu_custom_call.1} parent=1 // loop_header_branch
      %18 = sbr.rel (%p16) target = $region8
    $region5: #{tpu_custom_call.1} parent=1 // loop_body
      %s20 = ssub.s32 %s15, 1
      %s21 = ssub.s32 %s15, 2
      %s22 = sadd.s32 %s15, 1
      %s23 = ssub.s32 %s15, %s22
      %p24 = scmp.eq.s32.totalorder %s23, 0
      %s26 = sadd.s32 %s25, 1
      %s27 = scalar_select %p24, %s25, %s26
      %p30 = pneg %p24
      %p31 = scmp.eq.s32.totalorder %s15, 1
      %p32 = por %p30, %p31
      %p33 = scmp.ne.s32.totalorder %s25, %s28
      %p34 = scmp.eq.s32.totalorder %s15, 0
      %p35 = por %p33, %p34
      %p36 = scmp.ne.s32.totalorder %s25, %s28
      %p37 = scmp.eq.s32.totalorder %s20, 1
      %p38 = por %p36, %p37
      %p39 = scmp.ne.s32.totalorder %s28, %s29
      %p40 = scmp.eq.s32.totalorder %s20, 0
      %p41 = por %p39, %p40
      %p42 = scmp.ne.s32.totalorder %s28, %s29
      %p43 = scmp.eq.s32.totalorder %s21, 1
      %p44 = por %p42, %p43
      %p46 = scmp.ne.s32.totalorder %s29, %s45
      %p47 = scmp.eq.s32.totalorder %s21, 0
      %p48 = por %p46, %p47
      %s50 = sadd.s32 %s49, 1
      %p53 = scmp.eq.s32.totalorder %s15, 1
      %p54 = scmp.ne.s32.totalorder %s49, %s51
      %p55 = scmp.eq.s32.totalorder %s15, 0
      %p56 = por %p54, %p55
      %p57 = scmp.ne.s32.totalorder %s49, %s51
      %p58 = scmp.eq.s32.totalorder %s20, 1
      %p59 = por %p57, %p58
      %p60 = scmp.ne.s32.totalorder %s51, %s52
      %p61 = scmp.eq.s32.totalorder %s20, 0
      %p62 = por %p60, %p61
      %p63 = scmp.ne.s32.totalorder %s51, %s52
      %p64 = scmp.eq.s32.totalorder %s21, 1
      %p65 = por %p63, %p64
      %p67 = scmp.ne.s32.totalorder %s52, %s66
      %p68 = scmp.eq.s32.totalorder %s21, 0
      %p69 = por %p67, %p68
      %s70 = ssub.s32 %s15, %s22
      %p71 = scmp.eq.s32.totalorder %s70, 0
      %s73 = sadd.s32 %s72, 1
      %s74 = scalar_select %p71, %s72, %s73
      %p77 = pneg %p71
      %p78 = scmp.eq.s32.totalorder %s15, 1
      %p79 = por %p77, %p78
      %p80 = scmp.ne.s32.totalorder %s72, %s75
      %p81 = scmp.eq.s32.totalorder %s15, 0
      %p82 = por %p80, %p81
      %p83 = scmp.ne.s32.totalorder %s72, %s75
      %p84 = scmp.eq.s32.totalorder %s20, 1
      %p85 = por %p83, %p84
      %p86 = scmp.ne.s32.totalorder %s75, %s76
      %p87 = scmp.eq.s32.totalorder %s20, 0
      %p88 = por %p86, %p87
      %p89 = scmp.ne.s32.totalorder %s75, %s76
      %p90 = scmp.eq.s32.totalorder %s21, 1
      %p91 = por %p89, %p90
      %p93 = scmp.ne.s32.totalorder %s76, %s92
      %p94 = scmp.eq.s32.totalorder %s21, 0
      %p95 = por %p93, %p94
      %p96 = scmp.le.s32.totalorder 1, %s15
      %p97 = scmp.lt.s32.totalorder %s15, 3
      %p98 = pnand %p96, %p97
      %p99 = pneg %p98
      // Predicated region
      $region9: #{tpu_custom_call.1} parent=5 // pred_check
        _
      $region10: #{tpu_custom_call.1} parent=5 // pred_check_branch
        %101 = sbr.rel (%p98) target = $region12
      $region11: #{tpu_custom_call.1} parent=5 // pred_region
        %s102 = ssub.s32 %s15, 1
        // Predicated region
        $region13: #{tpu_custom_call.1} parent=11 // pred_check
          %p103 = pneg %p62
        $region14: #{tpu_custom_call.1} parent=11 // pred_check_branch
          %105 = sbr.rel (%p103) target = $region16
        $region15: #{tpu_custom_call.1} parent=11 // pred_region
          %107 = vsyncadd [#allocation6], 0
          %s108 = sshll.u32 %s1, 4
          %s109 = int_to_ptr.hbm [resolvable:$true] %s108
          %s110 = sshll.u32 [#allocation5], 4
          %s111 = int_to_ptr.vmem [resolvable:$true] %s110
          %116 = dma.hbm_to_vmem [thread:$0]  %s109, 4096, %s111, [#allocation6], 128, 128, 8
        $region16: #{tpu_custom_call.1} parent=11 // pred_fallthru
          _
      $region12: #{tpu_custom_call.1} parent=5 // pred_fallthru
        _
      %p117 = scmp.lt.s32.totalorder %s15, 2
      // Predicated region
      $region17: #{tpu_custom_call.1} parent=5 // pred_check
        %p118 = pneg %p117
      $region18: #{tpu_custom_call.1} parent=5 // pred_check_branch
        %120 = sbr.rel (%p118) target = $region20
      $region19: #{tpu_custom_call.1} parent=5 // pred_region
        // Predicated region
        $region21: #{tpu_custom_call.1} parent=19 // pred_check
          %p121 = pneg %p35
        $region22: #{tpu_custom_call.1} parent=19 // pred_check_branch
          %123 = sbr.rel (%p121) target = $region24
        $region23: #{tpu_custom_call.1} parent=19 // pred_region
          %s124 = sand.u32 %s25, 1
          %s125 = scalar_lea.sflag [#allocation3], %s124
          %s126 = sand.u32 %s25, 1
          %s127 = smul.addr %s126, 96
          %s128 = scalar_lea.vmem [#allocation2], %s127
          %s129 = smul.u32 6, %s15
          %131 = vsyncadd %s125, 0
          %s132 = smul.addr %s129, 2
          %s133 = smul.addr %s132, 8
          %s134 = scalar_lea.hbm %s0, %s133
          %s135 = sshll.u32 %s134, 4
          %s136 = int_to_ptr.hbm [resolvable:$true] %s135
          %s137 = sshll.u32 %s128, 4
          %s138 = int_to_ptr.vmem [resolvable:$true] %s137
          %143 = dma.hbm_to_vmem [thread:$0]  %s136, 1536, %s138, %s125, 256, 256, 16
        $region24: #{tpu_custom_call.1} parent=19 // pred_fallthru
          _
      $region20: #{tpu_custom_call.1} parent=5 // pred_fallthru
        _
      %p144 = scmp.le.s32.totalorder 1, %s15
      %p145 = scmp.lt.s32.totalorder %s15, 3
      %p146 = pnand %p144, %p145
      %p147 = pneg %p146
      // Predicated region
      $region25: #{tpu_custom_call.1} parent=5 // pred_check
        _
      $region26: #{tpu_custom_call.1} parent=5 // pred_check_branch
        %149 = sbr.rel (%p146) target = $region28
      $region27: #{tpu_custom_call.1} parent=5 // pred_region
        %s150 = ssub.s32 %s15, 1
        %s151 = sand.u32 %s28, 1
        %s152 = scalar_lea.sflag [#allocation3], %s151
        %s153 = sand.u32 %s28, 1
        %s154 = smul.addr %s153, 96
        %s155 = scalar_lea.vmem [#allocation2], %s154
        // Predicated region
        $region29: #{tpu_custom_call.1} parent=27 // pred_check
          %p156 = pneg %p41
        $region30: #{tpu_custom_call.1} parent=27 // pred_check_branch
          %158 = sbr.rel (%p156) target = $region32
        $region31: #{tpu_custom_call.1} parent=27 // pred_region
          %160 = dma.done %s152, 1536
        $region32: #{tpu_custom_call.1} parent=27 // pred_fallthru
          _
        // Predicated region
        $region33: #{tpu_custom_call.1} parent=27 // pred_check
          %p161 = pneg %p62
        $region34: #{tpu_custom_call.1} parent=27 // pred_check_branch
          %163 = sbr.rel (%p161) target = $region36
        $region35: #{tpu_custom_call.1} parent=27 // pred_region
          %165 = dma.done [#allocation6], 4096
        $region36: #{tpu_custom_call.1} parent=27 // pred_fallthru
          _
        %s166 = sand.u32 %s28, 1
        %s167 = scalar_lea.sflag [#allocation3], %s166
        %s168 = sand.u32 %s28, 1
        %s169 = smul.addr %s168, 96
        %s170 = scalar_lea.vmem [#allocation2], %s169
        %p171 = pneg %p41
        %p172 = pneg %p38
        %p173 = pneg %p62
        %p174 = pneg %p59
        %p175 = pneg %p88
        %p176 = pneg %p85
        %s177 = sand.u32 %s75, 1
        %s178 = scalar_lea.sflag [#allocation4], %s177
        %s179 = sand.u32 %s75, 1
        %s180 = smul.addr %s179, 48
        %s181 = scalar_lea.vmem [#allocation7], %s180
        %s182 = smul.u32 6, %s20
        %s183 = smul.u32 6, %s20
        %v184 = vld [vmem:[%s155] sm:$0xff]
        %v185 = vld [vmem:[%s155 + $0x8] sm:$0xff]
        %v186 = vld [vmem:[%s155 + $0x10] sm:$0xff]
        %v187 = vld [vmem:[%s155 + $0x18] sm:$0xff]
        %v188 = vld [vmem:[%s155 + $0x20] sm:$0xff]
        %v189 = vld [vmem:[%s155 + $0x28] sm:$0xff]
        %v190 = vld [vmem:[%s155 + $0x30] sm:$0xff]
        %v191 = vld [vmem:[%s155 + $0x38] sm:$0xff]
        %v192 = vld [vmem:[%s155 + $0x40] sm:$0xff]
        %v193 = vld [vmem:[%s155 + $0x48] sm:$0xff]
        %v194 = vld [vmem:[%s155 + $0x50] sm:$0xff]
        %v195 = vld [vmem:[%s155 + $0x58] sm:$0xff]
        %v196 = vld [vmem:[#allocation5] sm:$0xff]
        %v197 = vld [vmem:[#allocation5 + $0x8] sm:$0xff]
        %v198 = vld [vmem:[#allocation5 + $0x10] sm:$0xff]
        %v199 = vld [vmem:[#allocation5 + $0x18] sm:$0xff]
        %v200 = vld [vmem:[#allocation5 + $0x20] sm:$0xff]
        %v201 = vld [vmem:[#allocation5 + $0x28] sm:$0xff]
        %v202 = vld [vmem:[#allocation5 + $0x30] sm:$0xff]
        %v203 = vld [vmem:[#allocation5 + $0x38] sm:$0xff]
        %v204 = vld [vmem:[#allocation5 + $0x40] sm:$0xff]
        %v205 = vld [vmem:[#allocation5 + $0x48] sm:$0xff]
        %v206 = vld [vmem:[#allocation5 + $0x50] sm:$0xff]
        %v207 = vld [vmem:[#allocation5 + $0x58] sm:$0xff]
        %v208 = vld [vmem:[#allocation5 + $0x60] sm:$0xff]
        %v209 = vld [vmem:[#allocation5 + $0x68] sm:$0xff]
        %v210 = vld [vmem:[#allocation5 + $0x70] sm:$0xff]
        %v211 = vld [vmem:[#allocation5 + $0x78] sm:$0xff]
        %v212 = vld [vmem:[#allocation5 + $0x80] sm:$0xff]
        %v213 = vld [vmem:[#allocation5 + $0x88] sm:$0xff]
        %v214 = vld [vmem:[#allocation5 + $0x90] sm:$0xff]
        %v215 = vld [vmem:[#allocation5 + $0x98] sm:$0xff]
        %v216 = vld [vmem:[#allocation5 + $0xa0] sm:$0xff]
        %v217 = vld [vmem:[#allocation5 + $0xa8] sm:$0xff]
        %v218 = vld [vmem:[#allocation5 + $0xb0] sm:$0xff]
        %v219 = vld [vmem:[#allocation5 + $0xb8] sm:$0xff]
        %v220 = vld [vmem:[#allocation5 + $0xc0] sm:$0xff]
        %v221 = vld [vmem:[#allocation5 + $0xc8] sm:$0xff]
        %v222 = vld [vmem:[#allocation5 + $0xd0] sm:$0xff]
        %v223 = vld [vmem:[#allocation5 + $0xd8] sm:$0xff]
        %v224 = vld [vmem:[#allocation5 + $0xe0] sm:$0xff]
        %v225 = vld [vmem:[#allocation5 + $0xe8] sm:$0xff]
        %v226 = vld [vmem:[#allocation5 + $0xf0] sm:$0xff]
        %v227 = vld [vmem:[#allocation5 + $0xf8] sm:$0xff]
        %228 = vmatpush.msra.mxu0 %v211
        %229 = vmatpush.msra.mxu0 %v210
        %230 = vmatpush.msra.mxu0 %v209
        %231 = vmatpush.msra.mxu0 %v208
        %232 = vmatpush.msra.mxu0 %v207
        %233 = vmatpush.msra.mxu0 %v206
        %234 = vmatpush.msra.mxu0 %v205
        %235 = vmatpush.msra.mxu0 %v204
        %236 = vmatpush.msra.mxu0 %v203
        %237 = vmatpush.msra.mxu0 %v202
        %238 = vmatpush.msra.mxu0 %v201
        %239 = vmatpush.msra.mxu0 %v200
        %240 = vmatpush.msra.mxu0 %v199
        %241 = vmatpush.msra.mxu0 %v198
        %242 = vmatpush.msra.mxu0 %v197
        %243 = vmatpush.msra.mxu0 %v196
        %244 = vmatmul.f32.gmra.mxu0 %v184
        %v245 = vpop.f32.mrf.mxu0
        %v246 = vadd.f32 0.0, %v245
        %247 = vmatmul.f32.gmra.mxu0 %v186
        %v248 = vpop.f32.mrf.mxu0
        %v249 = vadd.f32 0.0, %v248
        %250 = vmatmul.f32.gmra.mxu0 %v188
        %v251 = vpop.f32.mrf.mxu0
        %v252 = vadd.f32 0.0, %v251
        %253 = vmatmul.f32.gmra.mxu0 %v190
        %v254 = vpop.f32.mrf.mxu0
        %v255 = vadd.f32 0.0, %v254
        %256 = vmatmul.f32.gmra.mxu0 %v192
        %v257 = vpop.f32.mrf.mxu0
        %v258 = vadd.f32 0.0, %v257
        %259 = vmatmul.f32.gmra.mxu0 %v194
        %v260 = vpop.f32.mrf.mxu0
        %v261 = vadd.f32 0.0, %v260
        %262 = vdwg.mxu0
        %263 = vmatpush.msra.mxu0 %v227
        %264 = vmatpush.msra.mxu0 %v226
        %265 = vmatpush.msra.mxu0 %v225
        %266 = vmatpush.msra.mxu0 %v224
        %267 = vmatpush.msra.mxu0 %v223
        %268 = vmatpush.msra.mxu0 %v222
        %269 = vmatpush.msra.mxu0 %v221
        %270 = vmatpush.msra.mxu0 %v220
        %271 = vmatpush.msra.mxu0 %v219
        %272 = vmatpush.msra.mxu0 %v218
        %273 = vmatpush.msra.mxu0 %v217
        %274 = vmatpush.msra.mxu0 %v216
        %275 = vmatpush.msra.mxu0 %v215
        %276 = vmatpush.msra.mxu0 %v214
        %277 = vmatpush.msra.mxu0 %v213
        %278 = vmatpush.msra.mxu0 %v212
        %279 = vmatmul.f32.gmra.mxu0 %v185
        %v280 = vpop.f32.mrf.mxu0
        %v281 = vadd.f32 %v246, %v280
        %282 = vmatmul.f32.gmra.mxu0 %v187
        %v283 = vpop.f32.mrf.mxu0
        %v284 = vadd.f32 %v249, %v283
        %285 = vmatmul.f32.gmra.mxu0 %v189
        %v286 = vpop.f32.mrf.mxu0
        %v287 = vadd.f32 %v252, %v286
        %288 = vmatmul.f32.gmra.mxu0 %v191
        %v289 = vpop.f32.mrf.mxu0
        %v290 = vadd.f32 %v255, %v289
        %291 = vmatmul.f32.gmra.mxu0 %v193
        %v292 = vpop.f32.mrf.mxu0
        %v293 = vadd.f32 %v258, %v292
        %294 = vmatmul.f32.gmra.mxu0 %v195
        %v295 = vpop.f32.mrf.mxu0
        %v296 = vadd.f32 %v261, %v295
        %297 = vdwg.mxu0
        %298 = vst [vmem:[%s181] sm:$0xff] %v281
        %299 = vst [vmem:[%s181 + $0x8] sm:$0xff] %v284
        %300 = vst [vmem:[%s181 + $0x10] sm:$0xff] %v287
        %301 = vst [vmem:[%s181 + $0x18] sm:$0xff] %v290
        %302 = vst [vmem:[%s181 + $0x20] sm:$0xff] %v293
        %303 = vst [vmem:[%s181 + $0x28] sm:$0xff] %v296
        %s304 = sand.u32 %s75, 1
        %s305 = scalar_lea.sflag [#allocation4], %s304
        %s306 = sand.u32 %s75, 1
        %s307 = smul.addr %s306, 48
        %s308 = scalar_lea.vmem [#allocation7], %s307
        // Predicated region
        $region37: #{tpu_custom_call.1} parent=27 // pred_check
          %p309 = pneg %p85
        $region38: #{tpu_custom_call.1} parent=27 // pred_check_branch
          %311 = sbr.rel (%p309) target = $region40
        $region39: #{tpu_custom_call.1} parent=27 // pred_region
          %s312 = smul.u32 6, %s20
          %314 = vsyncadd %s305, 0
          %s315 = smul.addr %s312, 8
          %s316 = scalar_lea.hbm %s2, %s315
          %s317 = sshll.u32 %s308, 4
          %s318 = int_to_ptr.vmem [resolvable:$true] %s317
          %s319 = sshll.u32 %s316, 4
          %s320 = int_to_ptr.hbm [resolvable:$true] %s319
          %325 = dma.vmem_to_hbm [thread:$0]  %s318, 768, %s320, %s305, 128, 128, 8
        $region40: #{tpu_custom_call.1} parent=27 // pred_fallthru
          _
      $region28: #{tpu_custom_call.1} parent=5 // pred_fallthru
        _
      %p326 = scmp.le.s32.totalorder 2, %s15
      // Predicated region
      $region41: #{tpu_custom_call.1} parent=5 // pred_check
        %p327 = pneg %p326
      $region42: #{tpu_custom_call.1} parent=5 // pred_check_branch
        %329 = sbr.rel (%p327) target = $region44
      $region43: #{tpu_custom_call.1} parent=5 // pred_region
        %s330 = ssub.s32 %s15, 2
        // Predicated region
        $region45: #{tpu_custom_call.1} parent=43 // pred_check
          %p331 = pneg %p91
        $region46: #{tpu_custom_call.1} parent=43 // pred_check_branch
          %333 = sbr.rel (%p331) target = $region48
        $region47: #{tpu_custom_call.1} parent=43 // pred_region
          %s334 = sand.u32 %s76, 1
          %s335 = scalar_lea.sflag [#allocation4], %s334
          %s336 = sand.u32 %s76, 1
          %s337 = smul.addr %s336, 48
          %s338 = scalar_lea.vmem [#allocation7], %s337
          %340 = dma.done %s335, 768
        $region48: #{tpu_custom_call.1} parent=43 // pred_fallthru
          _
      $region44: #{tpu_custom_call.1} parent=5 // pred_fallthru
        _
    $region6: #{tpu_custom_call.1} parent=1 // loop_footer
      %s19 = sadd.s32 1, %s15
    $region7: #{tpu_custom_call.1} parent=1 // loop_footer_branch
      %14 = sbr.rel target = $region3
    $region8: #{tpu_custom_call.1} parent=1 // loop_exit
      _
    %341 = vsyncpa [#allocation3], 1
    %s342 = scalar_lea.sflag [#allocation3], 1
    %343 = vsyncpa %s342, 1
    %344 = vsyncpa [#allocation6], 1
    %345 = vsyncpa [#allocation4], 1
    %s346 = scalar_lea.sflag [#allocation4], 1
    %347 = vsyncpa %s346, 1

</llo_original>
